<compile_context>
chip_gen: v7x
topology: tpu7x:2x2x1
jax: 0.10.0
libtpu: 0.0.40
codegen_flags: <defaults>
</compile_context>

<pallas_src>
from functools import partial

import jax
import jax.numpy as jnp
from jax import lax
from jax.experimental import pallas as pl
from jax.experimental.pallas import tpu as pltpu


def decoder_kernel(z_ref, p_ref, o_ref):
    TB, DIN = z_ref.shape
    D1 = DIN // 2
    D2 = D1 // 2

    # Packed-parameter row offsets (DIN and DIN+D1 are multiples of 8).
    R_W2 = DIN
    R_VEC = DIN + D1

    z = z_ref[...]                                                   # (TB, DIN) bf16
    w1 = p_ref[0:DIN, 0:D1]                                          # (DIN, D1) bf16
    w2 = p_ref[R_W2:R_W2 + D1, 0:D2]                                 # (D1, D2)  bf16
    b1 = p_ref[R_VEC:R_VEC + 1, 0:D1].astype(jnp.float32)            # (1, D1)
    b2 = p_ref[R_VEC + 1:R_VEC + 2, 0:D2].astype(jnp.float32)        # (1, D2)
    w3 = p_ref[R_VEC + 2:R_VEC + 3, 0:D2].astype(jnp.float32)        # (1, D2)

    # Linear1 (+ folded BN1): bf16 MXU matmul, f32 accumulate; LeakyReLU on the
    # VPU in f32.  (Dropout = identity in eval mode.)
    h1 = jnp.dot(z, w1, preferred_element_type=jnp.float32) + b1     # (TB, D1)
    h1 = jnp.where(h1 > 0, h1, 0.01 * h1)

    # Linear2 (+ folded BN2) -> LeakyReLU (Dropout = identity in eval mode).
    h2 = jnp.dot(h1.astype(jnp.bfloat16), w2,
                 preferred_element_type=jnp.float32) + b2            # (TB, D2)
    h2 = jnp.where(h2 > 0, h2, 0.01 * h2)

    # Final Linear(D2 -> 1, bias-free), emitted lane-dense as a (1, TB) row:
    # out_row = w3 @ h2^T  (M=1, K=D2, N=TB).  Both operands and the result are
    # lane-dense, avoiding the masked (TB, 1) column store of the old layout.
    out_row = lax.dot_general(w3, h2, (((1,), (1,)), ((), ())),
                              preferred_element_type=jnp.float32)    # (1, TB)
    o_ref[...] = out_row.astype(o_ref.dtype)


def pack_decoder_params(w1, b1, g1, be1, rm1, rv1,
                        w2, b2, g2, be2, rm2, rv2,
                        w3, eps=1e-5, dtype=jnp.bfloat16):
    """Fold eval-mode BatchNorm into the Linears and pack lane-dense (bf16).

    Layout of the returned (DIN + D1 + 8, 128) tensor:
      rows [0, DIN)          lanes [0, D1) : BN-folded Linear1 weight
      rows [DIN, DIN+D1)     lanes [0, D2) : BN-folded Linear2 weight
      row  DIN+D1            lanes [0, D1) : BN-folded Linear1 bias
      row  DIN+D1+1          lanes [0, D2) : BN-folded Linear2 bias
      row  DIN+D1+2          lanes [0, D2) : final (D2 -> 1) weight vector
    """
    DIN, D1 = w1.shape
    D1b, D2 = w2.shape
    assert D1b == D1, "w2 input dim must equal D1"
    assert D1 == DIN // 2 and D2 == D1 // 2, "module implies D1=DIN//2, D2=D1//2"
    assert DIN % 8 == 0 and D1 % 8 == 0, "packed layout needs 8-aligned dims"
    assert D1 <= 128, "lane-dense layout stores one vector per 128-lane row"
    assert w3.reshape(-1).shape[0] == D2, "w3 must have D2 elements"

    s1 = g1 / jnp.sqrt(rv1 + eps)
    t1 = be1 - rm1 * s1
    w1e = (w1 * s1[None, :]).astype(jnp.float32)
    b1e = (b1 * s1 + t1).astype(jnp.float32)

    s2 = g2 / jnp.sqrt(rv2 + eps)
    t2 = be2 - rm2 * s2
    w2e = (w2 * s2[None, :]).astype(jnp.float32)
    b2e = (b2 * s2 + t2).astype(jnp.float32)

    rows = DIN + D1 + 8
    p = jnp.zeros((rows, 128), jnp.float32)
    p = p.at[0:DIN, 0:D1].set(w1e)
    p = p.at[DIN:DIN + D1, 0:D2].set(w2e)
    p = p.at[DIN + D1, 0:D1].set(b1e)
    p = p.at[DIN + D1 + 1, 0:D2].set(b2e)
    p = p.at[DIN + D1 + 2, 0:D2].set(w3.reshape(-1).astype(jnp.float32))
    return p.astype(dtype)


@partial(jax.jit, static_argnames=("row_tile",))
def decoder_forward(z, params, *, row_tile=256):
    """z: (B, DIN); params: packed (DIN + D1 + 8, 128) bf16 -> (B,) float32."""
    B, DIN = z.shape
    D1 = DIN // 2
    rows, lanes = params.shape
    assert lanes == 128 and rows == DIN + D1 + 8, "params not packed for this DIN"

    if z.dtype != jnp.bfloat16:
        z = z.astype(jnp.bfloat16)          # halve z DMA; MXU is bf16-native

    B8 = ((B + 7) // 8) * 8
    TB = min(row_tile, B8)                  # row tile (multiple of 8)
    B_pad = ((B8 + TB - 1) // TB) * TB
    if B_pad != B:
        z = jnp.pad(z, ((0, B_pad - B), (0, 0)))

    out = pl.pallas_call(
        decoder_kernel,
        out_shape=jax.ShapeDtypeStruct((1, B_pad), jnp.float32),
        grid_spec=pltpu.PrefetchScalarGridSpec(
            num_scalar_prefetch=0,
            grid=(B_pad // TB,),
            in_specs=[
                pl.BlockSpec((TB, DIN), lambda i: (i, 0)),      # row tile of z
                pl.BlockSpec((rows, 128), lambda i: (0, 0)),    # params resident
            ],
            out_specs=pl.BlockSpec((1, TB), lambda i: (0, i)),  # lane-dense row
        ),
        compiler_params=pltpu.CompilerParams(
            dimension_semantics=("parallel",)),                 # v7x: 2 TCs
    )(z, params)
    return out[0, :B]                                           # .squeeze()


def decoder_ref(z, w1, b1, g1, be1, rm1, rv1,
                w2, b2, g2, be2, rm2, rv2, w3, eps=1e-5):
    """Pure-JAX reference mirroring the PyTorch module in eval mode (f32)."""
    h = z @ w1 + b1
    h = (h - rm1) / jnp.sqrt(rv1 + eps) * g1 + be1
    h = jnp.where(h > 0, h, 0.01 * h)                            # LeakyReLU(0.01)
    h = h @ w2 + b2
    h = (h - rm2) / jnp.sqrt(rv2 + eps) * g2 + be2
    h = jnp.where(h > 0, h, 0.01 * h)
    h = h @ w3.reshape(-1, 1)                                    # (B, 1)
    return h[:, 0]


if __name__ == "__main__":
    # Shapes implied by the module: dim_in = head_size * dim_z + 1.
    dim_z, head_size = 9, 7
    DIN = head_size * dim_z + 1        # 64
    D1 = DIN // 2                      # 32
    D2 = D1 // 2                       # 16
    B = 500                            # batched per the perf review; pads to 512

    key = jax.random.PRNGKey(0)
    ks = jax.random.split(key, 10)

    # Activations arrive in bf16 (as an upstream encoder would produce).
    z = jax.random.normal(ks[0], (B, DIN), jnp.float32).astype(jnp.bfloat16)

    # Linear weights stored pre-transposed (in, out); Linear3 has no bias.
    w1 = jax.random.normal(ks[1], (DIN, D1), jnp.float32) / jnp.sqrt(DIN)
    b1 = 0.1 * jax.random.normal(ks[2], (D1,), jnp.float32)
    w2 = jax.random.normal(ks[3], (D1, D2), jnp.float32) / jnp.sqrt(D1)
    b2 = 0.1 * jax.random.normal(ks[4], (D2,), jnp.float32)
    w3 = jax.random.normal(ks[5], (D2,), jnp.float32) / jnp.sqrt(D2)

    # BatchNorm1d affine params + running stats (eval mode).
    g1 = 1.0 + 0.1 * jax.random.normal(ks[6], (D1,), jnp.float32)
    be1 = 0.1 * jax.random.normal(ks[7], (D1,), jnp.float32)
    rm1 = 0.05 * jnp.arange(D1, dtype=jnp.float32) / D1
    rv1 = 1.0 + 0.1 * jnp.cos(jnp.arange(D1, dtype=jnp.float32))

    g2 = 1.0 + 0.1 * jax.random.normal(ks[8], (D2,), jnp.float32)
    be2 = 0.1 * jax.random.normal(ks[9], (D2,), jnp.float32)
    rm2 = 0.05 * jnp.arange(D2, dtype=jnp.float32) / D2
    rv2 = 1.0 + 0.1 * jnp.cos(jnp.arange(D2, dtype=jnp.float32))

    params = pack_decoder_params(w1, b1, g1, be1, rm1, rv1,
                                 w2, b2, g2, be2, rm2, rv2, w3)

    out = decoder_forward(z, params)
    out = jax.block_until_ready(out)

    ref = decoder_ref(z.astype(jnp.float32), w1, b1, g1, be1, rm1, rv1,
                      w2, b2, g2, be2, rm2, rv2, w3)

    assert out.shape == (B,), f"bad shape {out.shape}"
    max_err = float(jnp.max(jnp.abs(out - ref)))
    # bf16 weights/activations vs. f32 reference -> allow ~1e-1 absolute slack.
    assert max_err < 1e-1, f"mismatch vs reference (max abs err {max_err})"

    print("KERNEL_OK")
</pallas_src>

<mosaic_0001>
module attributes {stable_mosaic.version = 11 : i64} {
  func.func @decoder_kernel(%arg0: i32, %arg1: memref<256x64xbf16, #tpu.memory_space<vmem>>, %arg2: memref<104x128xbf16, #tpu.memory_space<vmem>>, %arg3: memref<1x256xf32, #tpu.memory_space<vmem>>) attributes {dimension_semantics = [#tpu.dimension_semantics<parallel>], iteration_bounds = array<i64: 2>, scalar_prefetch = 0 : i64, scratch_operands = 0 : i64, tpu.core_type = #tpu.core_type<tc>, window_params = [{transform_indices = @transform_0, window_bounds = array<i64: 256, 64>}, {pipeline_mode = #tpu.pipeline_mode<synchronous>, transform_indices = @transform_1, window_bounds = array<i64: 104, 128>}, {transform_indices = @transform_2, window_bounds = array<i64: 1, 256>}]} {
    %c0 = arith.constant 0 : index
    %c0_0 = arith.constant 0 : index
    %0 = vector.load %arg1[%c0, %c0_0] : memref<256x64xbf16, #tpu.memory_space<vmem>>, vector<256x64xbf16>
    %c0_1 = arith.constant 0 : index
    %c0_2 = arith.constant 0 : index
    %1 = vector.load %arg2[%c0_1, %c0_2] : memref<104x128xbf16, #tpu.memory_space<vmem>>, vector<64x32xbf16>
    %c64 = arith.constant 64 : index
    %c0_3 = arith.constant 0 : index
    %2 = vector.load %arg2[%c64, %c0_3] : memref<104x128xbf16, #tpu.memory_space<vmem>>, vector<32x16xbf16>
    %c96 = arith.constant 96 : index
    %c0_4 = arith.constant 0 : index
    %3 = vector.load %arg2[%c96, %c0_4] : memref<104x128xbf16, #tpu.memory_space<vmem>>, vector<1x32xbf16>
    %4 = arith.extf %3 : vector<1x32xbf16> to vector<1x32xf32>
    %c97 = arith.constant 97 : index
    %c0_5 = arith.constant 0 : index
    %5 = vector.load %arg2[%c97, %c0_5] : memref<104x128xbf16, #tpu.memory_space<vmem>>, vector<1x16xbf16>
    %6 = arith.extf %5 : vector<1x16xbf16> to vector<1x16xf32>
    %c98 = arith.constant 98 : index
    %c0_6 = arith.constant 0 : index
    %7 = vector.load %arg2[%c98, %c0_6] : memref<104x128xbf16, #tpu.memory_space<vmem>>, vector<1x16xbf16>
    %8 = arith.extf %7 : vector<1x16xbf16> to vector<1x16xf32>
    %cst = arith.constant dense<0.000000e+00> : vector<256x32xf32>
    %9 = tpu.matmul %0, %1, %cst {dimension_numbers = #tpu.dot_dimension_numbers<[1], [0], [0], [1], [0, 0, 1, 1], [], []>} : vector<256x64xbf16>, vector<64x32xbf16>, vector<256x32xf32> -> vector<256x32xf32>
    %10 = vector.broadcast %4 : vector<1x32xf32> to vector<256x32xf32>
    %11 = arith.addf %9, %10 : vector<256x32xf32>
    %cst_7 = arith.constant 0.000000e+00 : f32
    %12 = vector.broadcast %cst_7 : f32 to vector<256x32xf32>
    %13 = arith.cmpf ogt, %11, %12 : vector<256x32xf32>
    %cst_8 = arith.constant 0.00999999977 : f32
    %14 = vector.broadcast %cst_8 : f32 to vector<256x32xf32>
    %15 = arith.mulf %14, %11 : vector<256x32xf32>
    %16 = arith.select %13, %11, %15 : vector<256x32xi1>, vector<256x32xf32>
    %17 = arith.truncf %16 : vector<256x32xf32> to vector<256x32xbf16>
    %cst_9 = arith.constant dense<0.000000e+00> : vector<256x16xf32>
    %18 = tpu.matmul %17, %2, %cst_9 {dimension_numbers = #tpu.dot_dimension_numbers<[1], [0], [0], [1], [0, 0, 1, 1], [], []>} : vector<256x32xbf16>, vector<32x16xbf16>, vector<256x16xf32> -> vector<256x16xf32>
    %19 = vector.broadcast %6 : vector<1x16xf32> to vector<256x16xf32>
    %20 = arith.addf %18, %19 : vector<256x16xf32>
    %cst_10 = arith.constant 0.000000e+00 : f32
    %21 = vector.broadcast %cst_10 : f32 to vector<256x16xf32>
    %22 = arith.cmpf ogt, %20, %21 : vector<256x16xf32>
    %cst_11 = arith.constant 0.00999999977 : f32
    %23 = vector.broadcast %cst_11 : f32 to vector<256x16xf32>
    %24 = arith.mulf %23, %20 : vector<256x16xf32>
    %25 = arith.select %22, %20, %24 : vector<256x16xi1>, vector<256x16xf32>
    %cst_12 = arith.constant dense<0.000000e+00> : vector<1x256xf32>
    %26 = tpu.matmul %8, %25, %cst_12 {dimension_numbers = #tpu.dot_dimension_numbers<[1], [1], [0], [0], [0, 0, 1, 0], [], []>} : vector<1x16xf32>, vector<256x16xf32>, vector<1x256xf32> -> vector<1x256xf32>
    %c0_13 = arith.constant 0 : index
    %c0_14 = arith.constant 0 : index
    %27 = vector.load %arg3[%c0_13, %c0_14] : memref<1x256xf32, #tpu.memory_space<vmem>>, vector<1x256xf32>
    tpu.vector_store %arg3[%c0_13, %c0_14], %26 {strides = array<i32>} : memref<1x256xf32, #tpu.memory_space<vmem>>, vector<1x256xf32>,
    return
  }
  func.func @transform_0(%arg0: i32) -> (i32, i32) {
    %c0_i32 = arith.constant 0 : i32
    %c0_i32_0 = arith.constant 0 : i32
    return %arg0, %c0_i32 : i32, i32
  }
  func.func @transform_1(%arg0: i32) -> (i32, i32) {
    %c0_i32 = arith.constant 0 : i32
    %c0_i32_0 = arith.constant 0 : i32
    %c0_i32_1 = arith.constant 0 : i32
    return %c0_i32, %c0_i32_0 : i32, i32
  }
  func.func @transform_2(%arg0: i32) -> (i32, i32) {
    %c0_i32 = arith.constant 0 : i32
    %c0_i32_0 = arith.constant 0 : i32
    return %c0_i32, %arg0 : i32, i32
  }
}

</mosaic_0001>

<llo_original>
// kernel: decoder_forward.1
$region0: #{decoder_forward.1}
  #allocation0 [shape = 'u32[]', space=smem, size = 0x4, offset = 0x4, fixed_abs, tag = 'smem constant byte address 0x4 - core index']
  #allocation1 [shape = 'u32[144,128]{1,0:T(1,128)}', space=vmem, size = 0x12000, scoped, tag = 'internal scratch']
  %s0 = inlined_call_operand.vmem [shape: bf16[512,64], index: 0, kind: input, shape index: {}]
  %s1 = inlined_call_operand.vmem [shape: bf16[104,128], index: 1, kind: input, shape index: {}]
  %s2 = inlined_call_operand.hbm [shape: f32[1,512], index: 2, kind: output, shape index: {}]
  %s3 = sld [smem:[#allocation0]]
  $region41: #{decoder_forward.1} parent=0
    _
  %s5 = ssub.s32 1, %s3
  %s6 = scalar_select 0, %s5, %s3
  $region1: #{decoder_forward.1} parent=0
    #allocation2 [shape = 'u8[2048]{0}', space=vmem, size = 0x800, scoped, tag = 'output window, operand 0']
    #allocation3 [shape = 's32[2]{0}', space=sflag, size = 0x8, scoped, tag = 'scoped memory for decoder_forward.1']
    %7 = vsyncpa [#allocation3], 0
    %s8 = scalar_lea.sflag [#allocation3], 1
    %9 = vsyncpa %s8, 0
    loop: start=0, step=1, limit=4
    $region2: #{decoder_forward.1} parent=1 // loop_pre_header
      _
    $region3: #{decoder_forward.1} parent=1 // loop_header
      %s11 = sphi 0, %s15
      %p12 = scmp.ge.s32.totalorder %s11, 4
      %s21 = sphi 0, %s23
      %s24 = sphi 0, %s21
      %s25 = sphi 0, %s24
      %s41 = sphi 0, %s25
      %s45 = sphi 0, %s45
      %s47 = sphi 0, %s45
      %s48 = sphi 0, %s47
      %s62 = sphi 0, %s48
      %s68 = sphi 0, %s70
      %s71 = sphi 0, %s68
      %s72 = sphi 0, %s71
      %s88 = sphi 0, %s72
    $region4: #{decoder_forward.1} parent=1 // loop_header_branch
      %14 = sbr.rel (%p12) target = $region8
    $region5: #{decoder_forward.1} parent=1 // loop_body
      %s16 = ssub.s32 %s11, 1
      %s17 = ssub.s32 %s11, 2
      %s18 = sadd.s32 %s11, 1
      %s19 = ssub.s32 %s11, %s18
      %p20 = scmp.eq.s32.totalorder %s19, 0
      %s22 = sadd.s32 %s21, 1
      %s23 = scalar_select %p20, %s21, %s22
      %p26 = pneg %p20
      %p27 = scmp.eq.s32.totalorder %s11, 1
      %p28 = por %p26, %p27
      %p29 = scmp.ne.s32.totalorder %s21, %s24
      %p30 = scmp.eq.s32.totalorder %s11, 0
      %p31 = por %p29, %p30
      %p32 = scmp.ne.s32.totalorder %s21, %s24
      %p33 = scmp.eq.s32.totalorder %s16, 1
      %p34 = por %p32, %p33
      %p35 = scmp.ne.s32.totalorder %s24, %s25
      %p36 = scmp.eq.s32.totalorder %s16, 0
      %p37 = por %p35, %p36
      %p38 = scmp.ne.s32.totalorder %s24, %s25
      %p39 = scmp.eq.s32.totalorder %s17, 1
      %p40 = por %p38, %p39
      %p42 = scmp.ne.s32.totalorder %s25, %s41
      %p43 = scmp.eq.s32.totalorder %s17, 0
      %p44 = por %p42, %p43
      %s46 = sadd.s32 %s45, 1
      %p49 = scmp.eq.s32.totalorder %s11, 1
      %p50 = scmp.ne.s32.totalorder %s45, %s47
      %p51 = scmp.eq.s32.totalorder %s11, 0
      %p52 = por %p50, %p51
      %p53 = scmp.ne.s32.totalorder %s45, %s47
      %p54 = scmp.eq.s32.totalorder %s16, 1
      %p55 = por %p53, %p54
      %p56 = scmp.ne.s32.totalorder %s47, %s48
      %p57 = scmp.eq.s32.totalorder %s16, 0
      %p58 = por %p56, %p57
      %p59 = scmp.ne.s32.totalorder %s47, %s48
      %p60 = scmp.eq.s32.totalorder %s17, 1
      %p61 = por %p59, %p60
      %p63 = scmp.ne.s32.totalorder %s48, %s62
      %p64 = scmp.eq.s32.totalorder %s17, 0
      %p65 = por %p63, %p64
      %s66 = ssub.s32 %s11, %s18
      %p67 = scmp.eq.s32.totalorder %s66, 0
      %s69 = sadd.s32 %s68, 1
      %s70 = scalar_select %p67, %s68, %s69
      %p73 = pneg %p67
      %p74 = scmp.eq.s32.totalorder %s11, 1
      %p75 = por %p73, %p74
      %p76 = scmp.ne.s32.totalorder %s68, %s71
      %p77 = scmp.eq.s32.totalorder %s11, 0
      %p78 = por %p76, %p77
      %p79 = scmp.ne.s32.totalorder %s68, %s71
      %p80 = scmp.eq.s32.totalorder %s16, 1
      %p81 = por %p79, %p80
      %p82 = scmp.ne.s32.totalorder %s71, %s72
      %p83 = scmp.eq.s32.totalorder %s16, 0
      %p84 = por %p82, %p83
      %p85 = scmp.ne.s32.totalorder %s71, %s72
      %p86 = scmp.eq.s32.totalorder %s17, 1
      %p87 = por %p85, %p86
      %p89 = scmp.ne.s32.totalorder %s72, %s88
      %p90 = scmp.eq.s32.totalorder %s17, 0
      %p91 = por %p89, %p90
      %p92 = scmp.le.s32.totalorder 1, %s11
      %p93 = scmp.lt.s32.totalorder %s11, 3
      %p94 = pnand %p92, %p93
      %p95 = pneg %p94
      // Predicated region
      $region9: #{decoder_forward.1} parent=5 // pred_check
        _
      $region10: #{decoder_forward.1} parent=5 // pred_check_branch
        %97 = sbr.rel (%p94) target = $region12
      $region11: #{decoder_forward.1} parent=5 // pred_region
        %s98 = ssub.s32 %s11, 1
        // Predicated region
        $region13: #{decoder_forward.1} parent=11 // pred_check
          %p99 = pneg %p58
        $region14: #{decoder_forward.1} parent=11 // pred_check_branch
          %101 = sbr.rel (%p99) target = $region16
        $region15: #{decoder_forward.1} parent=11 // pred_region
          _
        $region16: #{decoder_forward.1} parent=11 // pred_fallthru
          _
      $region12: #{decoder_forward.1} parent=5 // pred_fallthru
        _
      %p102 = scmp.lt.s32.totalorder %s11, 2
      // Predicated region
      $region17: #{decoder_forward.1} parent=5 // pred_check
        %p103 = pneg %p102
      $region18: #{decoder_forward.1} parent=5 // pred_check_branch
        %105 = sbr.rel (%p103) target = $region20
      $region19: #{decoder_forward.1} parent=5 // pred_region
        // Predicated region
        $region21: #{decoder_forward.1} parent=19 // pred_check
          %p106 = pneg %p31
        $region22: #{decoder_forward.1} parent=19 // pred_check_branch
          %108 = sbr.rel (%p106) target = $region24
        $region23: #{decoder_forward.1} parent=19 // pred_region
          %s109 = smul.u32 32, %s11
          %p110 = scmp.lt.s32.totalorder %s109, 63
          %s111 = scalar_select %p110, %s109, 63
          %s112 = smul.addr %s111, 4
          %s113 = scalar_lea.vmem %s0, %s112
          %s114 = smul.u32 32, %s11
        $region24: #{decoder_forward.1} parent=19 // pred_fallthru
          _
      $region20: #{decoder_forward.1} parent=5 // pred_fallthru
        _
      %p115 = scmp.le.s32.totalorder 1, %s11
      %p116 = scmp.lt.s32.totalorder %s11, 3
      %p117 = pnand %p115, %p116
      %p118 = pneg %p117
      // Predicated region
      $region25: #{decoder_forward.1} parent=5 // pred_check
        _
      $region26: #{decoder_forward.1} parent=5 // pred_check_branch
        %120 = sbr.rel (%p117) target = $region28
      $region27: #{decoder_forward.1} parent=5 // pred_region
        %s121 = ssub.s32 %s11, 1
        %s122 = smul.u32 32, %s16
        %p123 = scmp.lt.s32.totalorder %s122, 63
        %s124 = scalar_select %p123, %s122, 63
        %s125 = smul.addr %s124, 4
        %s126 = scalar_lea.vmem %s0, %s125
        %p127 = pneg %p37
        %p128 = pneg %p34
        %p129 = pneg %p58
        %p130 = pneg %p55
        %p131 = pneg %p84
        %p132 = pneg %p81
        %s133 = sand.u32 %s71, 1
        %s134 = scalar_lea.sflag [#allocation3], %s133
        %s135 = sand.u32 %s71, 1
        %s136 = smul.addr %s135, 2
        %s137 = scalar_lea.vmem [#allocation2], %s136
        %s138 = smul.u32 32, %s16
        %p139 = scmp.lt.s32.totalorder %s138, 63
        %s140 = scalar_select %p139, %s138, 63
        %s141 = smul.addr %s140, 4
        %s142 = scalar_lea.vmem %s0, %s141
        %s143 = smul.u32 32, %s16
        %s144 = smul.u32 2, %s16
        %v146 = vld [vmem:[%s142] sm:$0xf]
        %v147 = vld [vmem:[%s142 + $0x4] sm:$0xf]
        %v148 = vld [vmem:[%s142 + $0x8] sm:$0xf]
        %v149 = vld [vmem:[%s142 + $0xc] sm:$0xf]
        %v150 = vld [vmem:[%s142 + $0x10] sm:$0xf]
        %v151 = vld [vmem:[%s142 + $0x14] sm:$0xf]
        %v152 = vld [vmem:[%s142 + $0x18] sm:$0xf]
        %v153 = vld [vmem:[%s142 + $0x1c] sm:$0xf]
        %v154 = vld [vmem:[%s142 + $0x20] sm:$0xf]
        %v155 = vld [vmem:[%s142 + $0x24] sm:$0xf]
        %v156 = vld [vmem:[%s142 + $0x28] sm:$0xf]
        %v157 = vld [vmem:[%s142 + $0x2c] sm:$0xf]
        %v158 = vld [vmem:[%s142 + $0x30] sm:$0xf]
        %v159 = vld [vmem:[%s142 + $0x34] sm:$0xf]
        %v160 = vld [vmem:[%s142 + $0x38] sm:$0xf]
        %v161 = vld [vmem:[%s142 + $0x3c] sm:$0xf]
        %v162 = vld [vmem:[%s142 + $0x40] sm:$0xf]
        %v163 = vld [vmem:[%s142 + $0x44] sm:$0xf]
        %v164 = vld [vmem:[%s142 + $0x48] sm:$0xf]
        %v165 = vld [vmem:[%s142 + $0x4c] sm:$0xf]
        %v166 = vld [vmem:[%s142 + $0x50] sm:$0xf]
        %v167 = vld [vmem:[%s142 + $0x54] sm:$0xf]
        %v168 = vld [vmem:[%s142 + $0x58] sm:$0xf]
        %v169 = vld [vmem:[%s142 + $0x5c] sm:$0xf]
        %v170 = vld [vmem:[%s142 + $0x60] sm:$0xf]
        %v171 = vld [vmem:[%s142 + $0x64] sm:$0xf]
        %v172 = vld [vmem:[%s142 + $0x68] sm:$0xf]
        %v173 = vld [vmem:[%s142 + $0x6c] sm:$0xf]
        %v174 = vld [vmem:[%s142 + $0x70] sm:$0xf]
        %v175 = vld [vmem:[%s142 + $0x74] sm:$0xf]
        %v176 = vld [vmem:[%s142 + $0x78] sm:$0xf]
        %v177 = vld [vmem:[%s142 + $0x7c] sm:$0xf]
        %v178 = vld [vmem:[%s1] sm:$0xf]
        %v179 = vld [vmem:[%s1 + $0x4] sm:$0xf]
        %v180 = vld [vmem:[%s1 + $0x8] sm:$0xf]
        %v181 = vld [vmem:[%s1 + $0xc] sm:$0xf]
        %v182 = vld [vmem:[%s1 + $0x10] sm:$0xf]
        %v183 = vld [vmem:[%s1 + $0x14] sm:$0xf]
        %v184 = vld [vmem:[%s1 + $0x18] sm:$0xf]
        %v185 = vld [vmem:[%s1 + $0x1c] sm:$0xf]
        %v186 = vld [vmem:[%s1 + $0x20] sm:$0xf]
        %v187 = vld [vmem:[%s1 + $0x24] sm:$0xf]
        %v188 = vld [vmem:[%s1 + $0x28] sm:$0xf]
        %v189 = vld [vmem:[%s1 + $0x2c] sm:$0xf]
        %v190 = vld [vmem:[%s1 + $0x30] sm:$0x1]
        %v191 = vunpack.c.l.bf16 %v190
        %v192 = vld [vmem:[%s1 + $0x30] sm:$0x2]
        %v193 = vunpack.c.l.bf16 %v192
        %v194 = vlaneseq
        %v195 = vshrl.u32 %v194, 7
        %v196 = vsub.s32 0, %v195
        %v197 = vrot.slane %v191, %v196
        %v230 = vunpack.c.l.b16 %v146
        %v231 = vunpack.c.l.b16 %v147
        %v232 = vunpack.c.l.b16 %v148
        %v233 = vunpack.c.l.b16 %v149
        %v234 = vunpack.c.l.b16 %v150
        %v235 = vunpack.c.l.b16 %v151
        %v236 = vunpack.c.l.b16 %v152
        %v237 = vunpack.c.l.b16 %v153
        %v238 = vunpack.c.l.b16 %v154
        %v239 = vunpack.c.l.b16 %v155
        %v240 = vunpack.c.l.b16 %v156
        %v241 = vunpack.c.l.b16 %v157
        %v242 = vunpack.c.l.b16 %v158
        %v243 = vunpack.c.l.b16 %v159
        %v244 = vunpack.c.l.b16 %v160
        %v245 = vunpack.c.l.b16 %v161
        %v246 = vunpack.c.l.b16 %v162
        %v247 = vunpack.c.l.b16 %v163
        %v248 = vunpack.c.l.b16 %v164
        %v249 = vunpack.c.l.b16 %v165
        %v250 = vunpack.c.l.b16 %v166
        %v251 = vunpack.c.l.b16 %v167
        %v252 = vunpack.c.l.b16 %v168
        %v253 = vunpack.c.l.b16 %v169
        %v254 = vunpack.c.l.b16 %v170
        %v255 = vunpack.c.l.b16 %v171
        %v256 = vunpack.c.l.b16 %v172
        %v257 = vunpack.c.l.b16 %v173
        %v258 = vunpack.c.l.b16 %v174
        %v259 = vunpack.c.l.b16 %v175
        %v260 = vunpack.c.l.b16 %v176
        %v261 = vunpack.c.l.b16 %v177
        %v262 = vpack.c.b16 %v231, %v230
        %v263 = vpack.c.b16 %v233, %v232
        %v264 = vpack.c.b16 %v235, %v234
        %v265 = vpack.c.b16 %v237, %v236
        %v266 = vpack.c.b16 %v239, %v238
        %v267 = vpack.c.b16 %v241, %v240
        %v268 = vpack.c.b16 %v243, %v242
        %v269 = vpack.c.b16 %v245, %v244
        %v270 = vpack.c.b16 %v247, %v246
        %v271 = vpack.c.b16 %v249, %v248
        %v272 = vpack.c.b16 %v251, %v250
        %v273 = vpack.c.b16 %v253, %v252
        %v274 = vpack.c.b16 %v255, %v254
        %v275 = vpack.c.b16 %v257, %v256
        %v276 = vpack.c.b16 %v259, %v258
        %v277 = vpack.c.b16 %v261, %v260
        %v286 = vunpack.c.l.b16 %v178
        %v287 = vunpack.c.l.b16 %v179
        %v288 = vunpack.c.l.b16 %v180
        %v289 = vunpack.c.l.b16 %v181
        %v290 = vunpack.c.l.b16 %v182
        %v291 = vunpack.c.l.b16 %v183
        %v292 = vunpack.c.l.b16 %v184
        %v293 = vunpack.c.l.b16 %v185
        %v294 = vpack.c.b16 %v287, %v286
        %v295 = vpack.c.b16 %v289, %v288
        %v296 = vpack.c.b16 %v291, %v290
        %v297 = vpack.c.b16 %v293, %v292
        %vm302 = vcmask 523264
        %v304 = vsel %vm302, %v262, 0
        %v307 = vsel %vm302, %v263, 0
        %v310 = vsel %vm302, %v264, 0
        %v313 = vsel %vm302, %v265, 0
        %v316 = vsel %vm302, %v266, 0
        %v319 = vsel %vm302, %v267, 0
        %v322 = vsel %vm302, %v268, 0
        %v325 = vsel %vm302, %v269, 0
        %v328 = vsel %vm302, %v270, 0
        %v331 = vsel %vm302, %v271, 0
        %v334 = vsel %vm302, %v272, 0
        %v337 = vsel %vm302, %v273, 0
        %v340 = vsel %vm302, %v274, 0
        %v343 = vsel %vm302, %v275, 0
        %v346 = vsel %vm302, %v276, 0
        %v349 = vsel %vm302, %v277, 0
        %351 = vmatprep.subr.bf16.mxu0 0
        %352 = vmatpush1.bf16.msra.mxu0 %v294
        %353 = vmatprep.subr.bf16.mxu0 0
        %354 = vmatpush1.bf16.msra.mxu0 %v295
        %355 = vmatprep.subr.bf16.mxu0 0
        %356 = vmatpush1.bf16.msra.mxu0 %v296
        %357 = vmatprep.subr.bf16.mxu0 0
        %358 = vmatpush1.bf16.msra.mxu0 %v297
        %359 = vmatprep.subr.bf16.mxu0 0
        %360 = vmatpush1.bf16.msra.mxu0 0
        %361 = vmatprep.subr.bf16.mxu0 0
        %362 = vmatpush1.bf16.msra.mxu0 0
        %363 = vmatprep.subr.bf16.mxu0 0
        %364 = vmatpush1.bf16.msra.mxu0 0
        %365 = vmatprep.subr.bf16.mxu0 0
        %366 = vmatpush1.bf16.msra.mxu0 0
        %367 = vmatprep.subr.bf16.mxu0 0
        %368 = vmatpush1.bf16.msra.mxu0 0
        %369 = vmatprep.subr.bf16.mxu0 0
        %370 = vmatpush1.bf16.msra.mxu0 0
        %371 = vmatprep.subr.bf16.mxu0 0
        %372 = vmatpush1.bf16.msra.mxu0 0
        %373 = vmatprep.subr.bf16.mxu0 0
        %374 = vmatpush1.bf16.msra.mxu0 0
        %375 = vmatprep.subr.bf16.mxu0 0
        %376 = vmatpush1.bf16.msra.mxu0 0
        %377 = vmatprep.subr.bf16.mxu0 0
        %378 = vmatpush1.bf16.msra.mxu0 0
        %379 = vmatprep.subr.bf16.mxu0 0
        %380 = vmatpush1.bf16.msra.mxu0 0
        %381 = vmatprep.subr.bf16.mxu0 0
        %382 = vmatpush1.bf16.msra.mxu0 0
        %383 = vmatprep.mubr.bf16.mxu0 0
        %384 = vmatmul.mubr.bf16.gmra.mrb[0].mxu0 %v304
        %v385 = vpop.f32.mrb[0].mxu0
        %v386 = vadd.f32 %v197, %v385
        %v387 = vpop.f32.mrb[0].mxu0
        %v388 = vpop.f32.mrb[0].mxu0
        %v389 = vadd.f32 %v197, %v388
        %v390 = vpop.f32.mrb[0].mxu0
        %391 = vmatprep.mubr.bf16.mxu0 0
        %392 = vmatmul.mubr.bf16.gmra.mrb[0].mxu0 %v307
        %v393 = vpop.f32.mrb[0].mxu0
        %v394 = vadd.f32 %v197, %v393
        %v395 = vpop.f32.mrb[0].mxu0
        %v396 = vpop.f32.mrb[0].mxu0
        %v397 = vadd.f32 %v197, %v396
        %v398 = vpop.f32.mrb[0].mxu0
        %399 = vmatprep.mubr.bf16.mxu0 0
        %400 = vmatmul.mubr.bf16.gmra.mrb[0].mxu0 %v310
        %v401 = vpop.f32.mrb[0].mxu0
        %v402 = vadd.f32 %v197, %v401
        %v403 = vpop.f32.mrb[0].mxu0
        %v404 = vpop.f32.mrb[0].mxu0
        %v405 = vadd.f32 %v197, %v404
        %v406 = vpop.f32.mrb[0].mxu0
        %407 = vmatprep.mubr.bf16.mxu0 0
        %408 = vmatmul.mubr.bf16.gmra.mrb[0].mxu0 %v313
        %v409 = vpop.f32.mrb[0].mxu0
        %v410 = vadd.f32 %v197, %v409
        %v411 = vpop.f32.mrb[0].mxu0
        %v412 = vpop.f32.mrb[0].mxu0
        %v413 = vadd.f32 %v197, %v412
        %v414 = vpop.f32.mrb[0].mxu0
        %415 = vmatprep.mubr.bf16.mxu0 0
        %416 = vmatmul.mubr.bf16.gmra.mrb[0].mxu0 %v316
        %v417 = vpop.f32.mrb[0].mxu0
        %v418 = vadd.f32 %v197, %v417
        %v419 = vpop.f32.mrb[0].mxu0
        %v420 = vpop.f32.mrb[0].mxu0
        %v421 = vadd.f32 %v197, %v420
        %v422 = vpop.f32.mrb[0].mxu0
        %423 = vmatprep.mubr.bf16.mxu0 0
        %424 = vmatmul.mubr.bf16.gmra.mrb[0].mxu0 %v319
        %v425 = vpop.f32.mrb[0].mxu0
        %v426 = vadd.f32 %v197, %v425
        %v427 = vpop.f32.mrb[0].mxu0
        %v428 = vpop.f32.mrb[0].mxu0
        %v429 = vadd.f32 %v197, %v428
        %v430 = vpop.f32.mrb[0].mxu0
        %431 = vmatprep.mubr.bf16.mxu0 0
        %432 = vmatmul.mubr.bf16.gmra.mrb[0].mxu0 %v322
        %v433 = vpop.f32.mrb[0].mxu0
        %v434 = vadd.f32 %v197, %v433
        %v435 = vpop.f32.mrb[0].mxu0
        %v436 = vpop.f32.mrb[0].mxu0
        %v437 = vadd.f32 %v197, %v436
        %v438 = vpop.f32.mrb[0].mxu0
        %439 = vmatprep.mubr.bf16.mxu0 0
        %440 = vmatmul.mubr.bf16.gmra.mrb[0].mxu0 %v325
        %v441 = vpop.f32.mrb[0].mxu0
        %v442 = vadd.f32 %v197, %v441
        %v443 = vpop.f32.mrb[0].mxu0
        %v444 = vpop.f32.mrb[0].mxu0
        %v445 = vadd.f32 %v197, %v444
        %v446 = vpop.f32.mrb[0].mxu0
        %447 = vmatprep.mubr.bf16.mxu0 0
        %448 = vmatmul.mubr.bf16.gmra.mrb[0].mxu0 %v328
        %v449 = vpop.f32.mrb[0].mxu0
        %v450 = vadd.f32 %v197, %v449
        %v451 = vpop.f32.mrb[0].mxu0
        %v452 = vpop.f32.mrb[0].mxu0
        %v453 = vadd.f32 %v197, %v452
        %v454 = vpop.f32.mrb[0].mxu0
        %455 = vmatprep.mubr.bf16.mxu0 0
        %456 = vmatmul.mubr.bf16.gmra.mrb[0].mxu0 %v331
        %v457 = vpop.f32.mrb[0].mxu0
        %v458 = vadd.f32 %v197, %v457
        %v459 = vpop.f32.mrb[0].mxu0
        %v460 = vpop.f32.mrb[0].mxu0
        %v461 = vadd.f32 %v197, %v460
        %v462 = vpop.f32.mrb[0].mxu0
        %463 = vmatprep.mubr.bf16.mxu0 0
        %464 = vmatmul.mubr.bf16.gmra.mrb[0].mxu0 %v334
        %v465 = vpop.f32.mrb[0].mxu0
        %v466 = vadd.f32 %v197, %v465
        %v467 = vpop.f32.mrb[0].mxu0
        %v468 = vpop.f32.mrb[0].mxu0
        %v469 = vadd.f32 %v197, %v468
        %v470 = vpop.f32.mrb[0].mxu0
        %471 = vmatprep.mubr.bf16.mxu0 0
        %472 = vmatmul.mubr.bf16.gmra.mrb[0].mxu0 %v337
        %v473 = vpop.f32.mrb[0].mxu0
        %v474 = vadd.f32 %v197, %v473
        %v475 = vpop.f32.mrb[0].mxu0
        %v476 = vpop.f32.mrb[0].mxu0
        %v477 = vadd.f32 %v197, %v476
        %v478 = vpop.f32.mrb[0].mxu0
        %479 = vmatprep.mubr.bf16.mxu0 0
        %480 = vmatmul.mubr.bf16.gmra.mrb[0].mxu0 %v340
        %v481 = vpop.f32.mrb[0].mxu0
        %v482 = vadd.f32 %v197, %v481
        %v483 = vpop.f32.mrb[0].mxu0
        %v484 = vpop.f32.mrb[0].mxu0
        %v485 = vadd.f32 %v197, %v484
        %v486 = vpop.f32.mrb[0].mxu0
        %487 = vmatprep.mubr.bf16.mxu0 0
        %488 = vmatmul.mubr.bf16.gmra.mrb[0].mxu0 %v343
        %v489 = vpop.f32.mrb[0].mxu0
        %v490 = vadd.f32 %v197, %v489
        %v491 = vpop.f32.mrb[0].mxu0
        %v492 = vpop.f32.mrb[0].mxu0
        %v493 = vadd.f32 %v197, %v492
        %v494 = vpop.f32.mrb[0].mxu0
        %495 = vmatprep.mubr.bf16.mxu0 0
        %496 = vmatmul.mubr.bf16.gmra.mrb[0].mxu0 %v346
        %v497 = vpop.f32.mrb[0].mxu0
        %v498 = vadd.f32 %v197, %v497
        %v499 = vpop.f32.mrb[0].mxu0
        %v500 = vpop.f32.mrb[0].mxu0
        %v501 = vadd.f32 %v197, %v500
        %v502 = vpop.f32.mrb[0].mxu0
        %503 = vmatprep.mubr.bf16.mxu0 0
        %504 = vmatmul.mubr.bf16.gmra.mrb[0].mxu0 %v349
        %v505 = vpop.f32.mrb[0].mxu0
        %v506 = vadd.f32 %v197, %v505
        %v507 = vpop.f32.mrb[0].mxu0
        %v508 = vpop.f32.mrb[0].mxu0
        %v509 = vadd.f32 %v197, %v508
        %v510 = vpop.f32.mrb[0].mxu0
        %511 = vdwg.mxu0
        %vm512 = vcmp.gt.f32.partialorder %v386, 0.0
        %vm513 = vcmp.gt.f32.partialorder %v389, 0.0
        %vm514 = vcmp.gt.f32.partialorder %v394, 0.0
        %vm515 = vcmp.gt.f32.partialorder %v397, 0.0
        %vm516 = vcmp.gt.f32.partialorder %v402, 0.0
        %vm517 = vcmp.gt.f32.partialorder %v405, 0.0
        %vm518 = vcmp.gt.f32.partialorder %v410, 0.0
        %vm519 = vcmp.gt.f32.partialorder %v413, 0.0
        %vm520 = vcmp.gt.f32.partialorder %v418, 0.0
        %vm521 = vcmp.gt.f32.partialorder %v421, 0.0
        %vm522 = vcmp.gt.f32.partialorder %v426, 0.0
        %vm523 = vcmp.gt.f32.partialorder %v429, 0.0
        %vm524 = vcmp.gt.f32.partialorder %v434, 0.0
        %vm525 = vcmp.gt.f32.partialorder %v437, 0.0
        %vm526 = vcmp.gt.f32.partialorder %v442, 0.0
        %vm527 = vcmp.gt.f32.partialorder %v445, 0.0
        %vm528 = vcmp.gt.f32.partialorder %v450, 0.0
        %vm529 = vcmp.gt.f32.partialorder %v453, 0.0
        %vm530 = vcmp.gt.f32.partialorder %v458, 0.0
        %vm531 = vcmp.gt.f32.partialorder %v461, 0.0
        %vm532 = vcmp.gt.f32.partialorder %v466, 0.0
        %vm533 = vcmp.gt.f32.partialorder %v469, 0.0
        %vm534 = vcmp.gt.f32.partialorder %v474, 0.0
        %vm535 = vcmp.gt.f32.partialorder %v477, 0.0
        %vm536 = vcmp.gt.f32.partialorder %v482, 0.0
        %vm537 = vcmp.gt.f32.partialorder %v485, 0.0
        %vm538 = vcmp.gt.f32.partialorder %v490, 0.0
        %vm539 = vcmp.gt.f32.partialorder %v493, 0.0
        %vm540 = vcmp.gt.f32.partialorder %v498, 0.0
        %vm541 = vcmp.gt.f32.partialorder %v501, 0.0
        %vm542 = vcmp.gt.f32.partialorder %v506, 0.0
        %vm543 = vcmp.gt.f32.partialorder %v509, 0.0
        %v544 = vmul.f32 %v386, 0.01
        %v545 = vmul.f32 %v389, 0.01
        %v546 = vmul.f32 %v394, 0.01
        %v547 = vmul.f32 %v397, 0.01
        %v548 = vmul.f32 %v402, 0.01
        %v549 = vmul.f32 %v405, 0.01
        %v550 = vmul.f32 %v410, 0.01
        %v551 = vmul.f32 %v413, 0.01
        %v552 = vmul.f32 %v418, 0.01
        %v553 = vmul.f32 %v421, 0.01
        %v554 = vmul.f32 %v426, 0.01
        %v555 = vmul.f32 %v429, 0.01
        %v556 = vmul.f32 %v434, 0.01
        %v557 = vmul.f32 %v437, 0.01
        %v558 = vmul.f32 %v442, 0.01
        %v559 = vmul.f32 %v445, 0.01
        %v560 = vmul.f32 %v450, 0.01
        %v561 = vmul.f32 %v453, 0.01
        %v562 = vmul.f32 %v458, 0.01
        %v563 = vmul.f32 %v461, 0.01
        %v564 = vmul.f32 %v466, 0.01
        %v565 = vmul.f32 %v469, 0.01
        %v566 = vmul.f32 %v474, 0.01
        %v567 = vmul.f32 %v477, 0.01
        %v568 = vmul.f32 %v482, 0.01
        %v569 = vmul.f32 %v485, 0.01
        %v570 = vmul.f32 %v490, 0.01
        %v571 = vmul.f32 %v493, 0.01
        %v572 = vmul.f32 %v498, 0.01
        %v573 = vmul.f32 %v501, 0.01
        %v574 = vmul.f32 %v506, 0.01
        %v575 = vmul.f32 %v509, 0.01
        %v576 = vsel %vm512, %v386, %v544
        %v577 = vsel %vm513, %v389, %v545
        %v578 = vsel %vm514, %v394, %v546
        %v579 = vsel %vm515, %v397, %v547
        %v580 = vsel %vm516, %v402, %v548
        %v581 = vsel %vm517, %v405, %v549
        %v582 = vsel %vm518, %v410, %v550
        %v583 = vsel %vm519, %v413, %v551
        %v584 = vsel %vm520, %v418, %v552
        %v585 = vsel %vm521, %v421, %v553
        %v586 = vsel %vm522, %v426, %v554
        %v587 = vsel %vm523, %v429, %v555
        %v588 = vsel %vm524, %v434, %v556
        %v589 = vsel %vm525, %v437, %v557
        %v590 = vsel %vm526, %v442, %v558
        %v591 = vsel %vm527, %v445, %v559
        %v592 = vsel %vm528, %v450, %v560
        %v593 = vsel %vm529, %v453, %v561
        %v594 = vsel %vm530, %v458, %v562
        %v595 = vsel %vm531, %v461, %v563
        %v596 = vsel %vm532, %v466, %v564
        %v597 = vsel %vm533, %v469, %v565
        %v598 = vsel %vm534, %v474, %v566
        %v599 = vsel %vm535, %v477, %v567
        %v600 = vsel %vm536, %v482, %v568
        %v601 = vsel %vm537, %v485, %v569
        %v602 = vsel %vm538, %v490, %v570
        %v603 = vsel %vm539, %v493, %v571
        %v604 = vsel %vm540, %v498, %v572
        %v605 = vsel %vm541, %v501, %v573
        %v606 = vsel %vm542, %v506, %v574
        %v607 = vsel %vm543, %v509, %v575
        %v608 = vpack.c.bf16 %v577, %v576
        %v609 = vpack.c.bf16 %v579, %v578
        %v610 = vpack.c.bf16 %v581, %v580
        %v611 = vpack.c.bf16 %v583, %v582
        %v612 = vpack.c.bf16 %v585, %v584
        %v613 = vpack.c.bf16 %v587, %v586
        %v614 = vpack.c.bf16 %v589, %v588
        %v615 = vpack.c.bf16 %v591, %v590
        %v616 = vpack.c.bf16 %v593, %v592
        %v617 = vpack.c.bf16 %v595, %v594
        %v618 = vpack.c.bf16 %v597, %v596
        %v619 = vpack.c.bf16 %v599, %v598
        %v620 = vpack.c.bf16 %v601, %v600
        %v621 = vpack.c.bf16 %v603, %v602
        %v622 = vpack.c.bf16 %v605, %v604
        %v623 = vpack.c.bf16 %v607, %v606
        %v624 = vlaneseq
        %v625 = vshrl.u32 %v624, 7
        %v626 = vsub.s32 1, %v625
        %v627 = vrot.slane %v191, %v626
        %v632 = vunpack.c.l.b16 %v186
        %v633 = vunpack.c.l.b16 %v187
        %v634 = vunpack.c.l.b16 %v188
        %v635 = vunpack.c.l.b16 %v189
        %v636 = vpack.c.b16 %v633, %v632
        %v637 = vpack.c.b16 %v635, %v634
        %vm640 = vcmask 261120
        %v642 = vsel %vm640, %v608, 0
        %v645 = vsel %vm640, %v609, 0
        %v648 = vsel %vm640, %v610, 0
        %v651 = vsel %vm640, %v611, 0
        %v654 = vsel %vm640, %v612, 0
        %v657 = vsel %vm640, %v613, 0
        %v660 = vsel %vm640, %v614, 0
        %v663 = vsel %vm640, %v615, 0
        %v666 = vsel %vm640, %v616, 0
        %v669 = vsel %vm640, %v617, 0
        %v672 = vsel %vm640, %v618, 0
        %v675 = vsel %vm640, %v619, 0
        %v678 = vsel %vm640, %v620, 0
        %v681 = vsel %vm640, %v621, 0
        %v684 = vsel %vm640, %v622, 0
        %v687 = vsel %vm640, %v623, 0
        %689 = vmatprep.subr.bf16.mxu0 0
        %690 = vmatpush1.bf16.msra.mxu0 %v636
        %691 = vmatprep.subr.bf16.mxu0 0
        %692 = vmatpush1.bf16.msra.mxu0 %v637
        %693 = vmatprep.subr.bf16.mxu0 0
        %694 = vmatpush1.bf16.msra.mxu0 0
        %695 = vmatprep.subr.bf16.mxu0 0
        %696 = vmatpush1.bf16.msra.mxu0 0
        %697 = vmatprep.subr.bf16.mxu0 0
        %698 = vmatpush1.bf16.msra.mxu0 0
        %699 = vmatprep.subr.bf16.mxu0 0
        %700 = vmatpush1.bf16.msra.mxu0 0
        %701 = vmatprep.subr.bf16.mxu0 0
        %702 = vmatpush1.bf16.msra.mxu0 0
        %703 = vmatprep.subr.bf16.mxu0 0
        %704 = vmatpush1.bf16.msra.mxu0 0
        %705 = vmatprep.subr.bf16.mxu0 0
        %706 = vmatpush1.bf16.msra.mxu0 0
        %707 = vmatprep.subr.bf16.mxu0 0
        %708 = vmatpush1.bf16.msra.mxu0 0
        %709 = vmatprep.subr.bf16.mxu0 0
        %710 = vmatpush1.bf16.msra.mxu0 0
        %711 = vmatprep.subr.bf16.mxu0 0
        %712 = vmatpush1.bf16.msra.mxu0 0
        %713 = vmatprep.subr.bf16.mxu0 0
        %714 = vmatpush1.bf16.msra.mxu0 0
        %715 = vmatprep.subr.bf16.mxu0 0
        %716 = vmatpush1.bf16.msra.mxu0 0
        %717 = vmatprep.subr.bf16.mxu0 0
        %718 = vmatpush1.bf16.msra.mxu0 0
        %719 = vmatprep.subr.bf16.mxu0 0
        %720 = vmatpush1.bf16.msra.mxu0 0
        %721 = vmatprep.mubr.bf16.mxu0 0
        %722 = vmatmul.mubr.bf16.gmra.mrb[0].mxu0 %v642
        %v723 = vpop.f32.mrb[0].mxu0
        %v724 = vadd.f32 %v627, %v723
        %v725 = vpop.f32.mrb[0].mxu0
        %v726 = vpop.f32.mrb[0].mxu0
        %v727 = vadd.f32 %v627, %v726
        %v728 = vpop.f32.mrb[0].mxu0
        %729 = vmatprep.mubr.bf16.mxu0 0
        %730 = vmatmul.mubr.bf16.gmra.mrb[0].mxu0 %v645
        %v731 = vpop.f32.mrb[0].mxu0
        %v732 = vadd.f32 %v627, %v731
        %v733 = vpop.f32.mrb[0].mxu0
        %v734 = vpop.f32.mrb[0].mxu0
        %v735 = vadd.f32 %v627, %v734
        %v736 = vpop.f32.mrb[0].mxu0
        %737 = vmatprep.mubr.bf16.mxu0 0
        %738 = vmatmul.mubr.bf16.gmra.mrb[0].mxu0 %v648
        %v739 = vpop.f32.mrb[0].mxu0
        %v740 = vadd.f32 %v627, %v739
        %v741 = vpop.f32.mrb[0].mxu0
        %v742 = vpop.f32.mrb[0].mxu0
        %v743 = vadd.f32 %v627, %v742
        %v744 = vpop.f32.mrb[0].mxu0
        %745 = vmatprep.mubr.bf16.mxu0 0
        %746 = vmatmul.mubr.bf16.gmra.mrb[0].mxu0 %v651
        %v747 = vpop.f32.mrb[0].mxu0
        %v748 = vadd.f32 %v627, %v747
        %v749 = vpop.f32.mrb[0].mxu0
        %v750 = vpop.f32.mrb[0].mxu0
        %v751 = vadd.f32 %v627, %v750
        %v752 = vpop.f32.mrb[0].mxu0
        %753 = vmatprep.mubr.bf16.mxu0 0
        %754 = vmatmul.mubr.bf16.gmra.mrb[0].mxu0 %v654
        %v755 = vpop.f32.mrb[0].mxu0
        %v756 = vadd.f32 %v627, %v755
        %v757 = vpop.f32.mrb[0].mxu0
        %v758 = vpop.f32.mrb[0].mxu0
        %v759 = vadd.f32 %v627, %v758
        %v760 = vpop.f32.mrb[0].mxu0
        %761 = vmatprep.mubr.bf16.mxu0 0
        %762 = vmatmul.mubr.bf16.gmra.mrb[0].mxu0 %v657
        %v763 = vpop.f32.mrb[0].mxu0
        %v764 = vadd.f32 %v627, %v763
        %v765 = vpop.f32.mrb[0].mxu0
        %v766 = vpop.f32.mrb[0].mxu0
        %v767 = vadd.f32 %v627, %v766
        %v768 = vpop.f32.mrb[0].mxu0
        %769 = vmatprep.mubr.bf16.mxu0 0
        %770 = vmatmul.mubr.bf16.gmra.mrb[0].mxu0 %v660
        %v771 = vpop.f32.mrb[0].mxu0
        %v772 = vadd.f32 %v627, %v771
        %v773 = vpop.f32.mrb[0].mxu0
        %v774 = vpop.f32.mrb[0].mxu0
        %v775 = vadd.f32 %v627, %v774
        %v776 = vpop.f32.mrb[0].mxu0
        %777 = vmatprep.mubr.bf16.mxu0 0
        %778 = vmatmul.mubr.bf16.gmra.mrb[0].mxu0 %v663
        %v779 = vpop.f32.mrb[0].mxu0
        %v780 = vadd.f32 %v627, %v779
        %v781 = vpop.f32.mrb[0].mxu0
        %v782 = vpop.f32.mrb[0].mxu0
        %v783 = vadd.f32 %v627, %v782
        %v784 = vpop.f32.mrb[0].mxu0
        %785 = vmatprep.mubr.bf16.mxu0 0
        %786 = vmatmul.mubr.bf16.gmra.mrb[0].mxu0 %v666
        %v787 = vpop.f32.mrb[0].mxu0
        %v788 = vadd.f32 %v627, %v787
        %v789 = vpop.f32.mrb[0].mxu0
        %v790 = vpop.f32.mrb[0].mxu0
        %v791 = vadd.f32 %v627, %v790
        %v792 = vpop.f32.mrb[0].mxu0
        %793 = vmatprep.mubr.bf16.mxu0 0
        %794 = vmatmul.mubr.bf16.gmra.mrb[0].mxu0 %v669
        %v795 = vpop.f32.mrb[0].mxu0
        %v796 = vadd.f32 %v627, %v795
        %v797 = vpop.f32.mrb[0].mxu0
        %v798 = vpop.f32.mrb[0].mxu0
        %v799 = vadd.f32 %v627, %v798
        %v800 = vpop.f32.mrb[0].mxu0
        %801 = vmatprep.mubr.bf16.mxu0 0
        %802 = vmatmul.mubr.bf16.gmra.mrb[0].mxu0 %v672
        %v803 = vpop.f32.mrb[0].mxu0
        %v804 = vadd.f32 %v627, %v803
        %v805 = vpop.f32.mrb[0].mxu0
        %v806 = vpop.f32.mrb[0].mxu0
        %v807 = vadd.f32 %v627, %v806
        %v808 = vpop.f32.mrb[0].mxu0
        %809 = vmatprep.mubr.bf16.mxu0 0
        %810 = vmatmul.mubr.bf16.gmra.mrb[0].mxu0 %v675
        %v811 = vpop.f32.mrb[0].mxu0
        %v812 = vadd.f32 %v627, %v811
        %v813 = vpop.f32.mrb[0].mxu0
        %v814 = vpop.f32.mrb[0].mxu0
        %v815 = vadd.f32 %v627, %v814
        %v816 = vpop.f32.mrb[0].mxu0
        %817 = vmatprep.mubr.bf16.mxu0 0
        %818 = vmatmul.mubr.bf16.gmra.mrb[0].mxu0 %v678
        %v819 = vpop.f32.mrb[0].mxu0
        %v820 = vadd.f32 %v627, %v819
        %v821 = vpop.f32.mrb[0].mxu0
        %v822 = vpop.f32.mrb[0].mxu0
        %v823 = vadd.f32 %v627, %v822
        %v824 = vpop.f32.mrb[0].mxu0
        %825 = vmatprep.mubr.bf16.mxu0 0
        %826 = vmatmul.mubr.bf16.gmra.mrb[0].mxu0 %v681
        %v827 = vpop.f32.mrb[0].mxu0
        %v828 = vadd.f32 %v627, %v827
        %v829 = vpop.f32.mrb[0].mxu0
        %v830 = vpop.f32.mrb[0].mxu0
        %v831 = vadd.f32 %v627, %v830
        %v832 = vpop.f32.mrb[0].mxu0
        %833 = vmatprep.mubr.bf16.mxu0 0
        %834 = vmatmul.mubr.bf16.gmra.mrb[0].mxu0 %v684
        %v835 = vpop.f32.mrb[0].mxu0
        %v836 = vadd.f32 %v627, %v835
        %v837 = vpop.f32.mrb[0].mxu0
        %v838 = vpop.f32.mrb[0].mxu0
        %v839 = vadd.f32 %v627, %v838
        %v840 = vpop.f32.mrb[0].mxu0
        %841 = vmatprep.mubr.bf16.mxu0 0
        %842 = vmatmul.mubr.bf16.gmra.mrb[0].mxu0 %v687
        %v843 = vpop.f32.mrb[0].mxu0
        %v844 = vadd.f32 %v627, %v843
        %v845 = vpop.f32.mrb[0].mxu0
        %v846 = vpop.f32.mrb[0].mxu0
        %v847 = vadd.f32 %v627, %v846
        %v848 = vpop.f32.mrb[0].mxu0
        %849 = vdwg.mxu0
        %vm850 = vcmp.gt.f32.partialorder %v724, 0.0
        %vm851 = vcmp.gt.f32.partialorder %v727, 0.0
        %vm852 = vcmp.gt.f32.partialorder %v732, 0.0
        %vm853 = vcmp.gt.f32.partialorder %v735, 0.0
        %vm854 = vcmp.gt.f32.partialorder %v740, 0.0
        %vm855 = vcmp.gt.f32.partialorder %v743, 0.0
        %vm856 = vcmp.gt.f32.partialorder %v748, 0.0
        %vm857 = vcmp.gt.f32.partialorder %v751, 0.0
        %vm858 = vcmp.gt.f32.partialorder %v756, 0.0
        %vm859 = vcmp.gt.f32.partialorder %v759, 0.0
        %vm860 = vcmp.gt.f32.partialorder %v764, 0.0
        %vm861 = vcmp.gt.f32.partialorder %v767, 0.0
        %vm862 = vcmp.gt.f32.partialorder %v772, 0.0
        %vm863 = vcmp.gt.f32.partialorder %v775, 0.0
        %vm864 = vcmp.gt.f32.partialorder %v780, 0.0
        %vm865 = vcmp.gt.f32.partialorder %v783, 0.0
        %vm866 = vcmp.gt.f32.partialorder %v788, 0.0
        %vm867 = vcmp.gt.f32.partialorder %v791, 0.0
        %vm868 = vcmp.gt.f32.partialorder %v796, 0.0
        %vm869 = vcmp.gt.f32.partialorder %v799, 0.0
        %vm870 = vcmp.gt.f32.partialorder %v804, 0.0
        %vm871 = vcmp.gt.f32.partialorder %v807, 0.0
        %vm872 = vcmp.gt.f32.partialorder %v812, 0.0
        %vm873 = vcmp.gt.f32.partialorder %v815, 0.0
        %vm874 = vcmp.gt.f32.partialorder %v820, 0.0
        %vm875 = vcmp.gt.f32.partialorder %v823, 0.0
        %vm876 = vcmp.gt.f32.partialorder %v828, 0.0
        %vm877 = vcmp.gt.f32.partialorder %v831, 0.0
        %vm878 = vcmp.gt.f32.partialorder %v836, 0.0
        %vm879 = vcmp.gt.f32.partialorder %v839, 0.0
        %vm880 = vcmp.gt.f32.partialorder %v844, 0.0
        %vm881 = vcmp.gt.f32.partialorder %v847, 0.0
        %v882 = vmul.f32 %v724, 0.01
        %v883 = vmul.f32 %v727, 0.01
        %v884 = vmul.f32 %v732, 0.01
        %v885 = vmul.f32 %v735, 0.01
        %v886 = vmul.f32 %v740, 0.01
        %v887 = vmul.f32 %v743, 0.01
        %v888 = vmul.f32 %v748, 0.01
        %v889 = vmul.f32 %v751, 0.01
        %v890 = vmul.f32 %v756, 0.01
        %v891 = vmul.f32 %v759, 0.01
        %v892 = vmul.f32 %v764, 0.01
        %v893 = vmul.f32 %v767, 0.01
        %v894 = vmul.f32 %v772, 0.01
        %v895 = vmul.f32 %v775, 0.01
        %v896 = vmul.f32 %v780, 0.01
        %v897 = vmul.f32 %v783, 0.01
        %v898 = vmul.f32 %v788, 0.01
        %v899 = vmul.f32 %v791, 0.01
        %v900 = vmul.f32 %v796, 0.01
        %v901 = vmul.f32 %v799, 0.01
        %v902 = vmul.f32 %v804, 0.01
        %v903 = vmul.f32 %v807, 0.01
        %v904 = vmul.f32 %v812, 0.01
        %v905 = vmul.f32 %v815, 0.01
        %v906 = vmul.f32 %v820, 0.01
        %v907 = vmul.f32 %v823, 0.01
        %v908 = vmul.f32 %v828, 0.01
        %v909 = vmul.f32 %v831, 0.01
        %v910 = vmul.f32 %v836, 0.01
        %v911 = vmul.f32 %v839, 0.01
        %v912 = vmul.f32 %v844, 0.01
        %v913 = vmul.f32 %v847, 0.01
        %v914 = vsel %vm850, %v724, %v882
        %v915 = vsel %vm851, %v727, %v883
        %v916 = vsel %vm852, %v732, %v884
        %v917 = vsel %vm853, %v735, %v885
        %v918 = vsel %vm854, %v740, %v886
        %v919 = vsel %vm855, %v743, %v887
        %v920 = vsel %vm856, %v748, %v888
        %v921 = vsel %vm857, %v751, %v889
        %v922 = vsel %vm858, %v756, %v890
        %v923 = vsel %vm859, %v759, %v891
        %v924 = vsel %vm860, %v764, %v892
        %v925 = vsel %vm861, %v767, %v893
        %v926 = vsel %vm862, %v772, %v894
        %v927 = vsel %vm863, %v775, %v895
        %v928 = vsel %vm864, %v780, %v896
        %v929 = vsel %vm865, %v783, %v897
        %v930 = vsel %vm866, %v788, %v898
        %v931 = vsel %vm867, %v791, %v899
        %v932 = vsel %vm868, %v796, %v900
        %v933 = vsel %vm869, %v799, %v901
        %v934 = vsel %vm870, %v804, %v902
        %v935 = vsel %vm871, %v807, %v903
        %v936 = vsel %vm872, %v812, %v904
        %v937 = vsel %vm873, %v815, %v905
        %v938 = vsel %vm874, %v820, %v906
        %v939 = vsel %vm875, %v823, %v907
        %v940 = vsel %vm876, %v828, %v908
        %v941 = vsel %vm877, %v831, %v909
        %v942 = vsel %vm878, %v836, %v910
        %v943 = vsel %vm879, %v839, %v911
        %v944 = vsel %vm880, %v844, %v912
        %v945 = vsel %vm881, %v847, %v913
        %v947 = vrot.slane %v193, 2
        %vm948 = vcmask 130048
        %v949 = vsel %vm948, %v947, 0
        %v952 = vsel %vm948, %v914, 0
        %v955 = vsel %vm948, %v915, 0
        %v958 = vsel %vm948, %v916, 0
        %v961 = vsel %vm948, %v917, 0
        %v964 = vsel %vm948, %v918, 0
        %v967 = vsel %vm948, %v919, 0
        %v970 = vsel %vm948, %v920, 0
        %v973 = vsel %vm948, %v921, 0
        %v976 = vsel %vm948, %v922, 0
        %v979 = vsel %vm948, %v923, 0
        %v982 = vsel %vm948, %v924, 0
        %v985 = vsel %vm948, %v925, 0
        %v988 = vsel %vm948, %v926, 0
        %v991 = vsel %vm948, %v927, 0
        %v994 = vsel %vm948, %v928, 0
        %v997 = vsel %vm948, %v929, 0
        %v1000 = vsel %vm948, %v930, 0
        %v1003 = vsel %vm948, %v931, 0
        %v1006 = vsel %vm948, %v932, 0
        %v1009 = vsel %vm948, %v933, 0
        %v1012 = vsel %vm948, %v934, 0
        %v1015 = vsel %vm948, %v935, 0
        %v1018 = vsel %vm948, %v936, 0
        %v1021 = vsel %vm948, %v937, 0
        %v1024 = vsel %vm948, %v938, 0
        %v1027 = vsel %vm948, %v939, 0
        %v1030 = vsel %vm948, %v940, 0
        %v1033 = vsel %vm948, %v941, 0
        %v1036 = vsel %vm948, %v942, 0
        %v1039 = vsel %vm948, %v943, 0
        %v1042 = vsel %vm948, %v944, 0
        %v1045 = vsel %vm948, %v945, 0
        %1047 = vmatprep.subr.mxu0 0.0
        %1048 = vmatpush1.xpose.msra.mxu0 %v952
        %1049 = vmatprep.subr.mxu0 0.0
        %1050 = vmatpush1.xpose.msra.mxu0 %v955
        %1051 = vmatprep.subr.mxu0 0.0
        %1052 = vmatpush1.xpose.msra.mxu0 %v958
        %1053 = vmatprep.subr.mxu0 0.0
        %1054 = vmatpush1.xpose.msra.mxu0 %v961
        %1055 = vmatprep.subr.mxu0 0.0
        %1056 = vmatpush1.xpose.msra.mxu0 %v964
        %1057 = vmatprep.subr.mxu0 0.0
        %1058 = vmatpush1.xpose.msra.mxu0 %v967
        %1059 = vmatprep.subr.mxu0 0.0
        %1060 = vmatpush1.xpose.msra.mxu0 %v970
        %1061 = vmatprep.subr.mxu0 0.0
        %1062 = vmatpush1.xpose.msra.mxu0 %v973
        %1063 = vmatprep.subr.mxu0 0.0
        %1064 = vmatpush1.xpose.msra.mxu0 %v976
        %1065 = vmatprep.subr.mxu0 0.0
        %1066 = vmatpush1.xpose.msra.mxu0 %v979
        %1067 = vmatprep.subr.mxu0 0.0
        %1068 = vmatpush1.xpose.msra.mxu0 %v982
        %1069 = vmatprep.subr.mxu0 0.0
        %1070 = vmatpush1.xpose.msra.mxu0 %v985
        %1071 = vmatprep.subr.mxu0 0.0
        %1072 = vmatpush1.xpose.msra.mxu0 %v988
        %1073 = vmatprep.subr.mxu0 0.0
        %1074 = vmatpush1.xpose.msra.mxu0 %v991
        %1075 = vmatprep.subr.mxu0 0.0
        %1076 = vmatpush1.xpose.msra.mxu0 %v994
        %1077 = vmatprep.subr.mxu0 0.0
        %1078 = vmatpush1.xpose.msra.mxu0 %v997
        %1079 = vmatprep.subr.mxu0 0.0
        %1080 = vmatpush1.xpose.msra.mxu0 %v1000
        %1081 = vmatprep.subr.mxu0 0.0
        %1082 = vmatpush1.xpose.msra.mxu0 %v1003
        %1083 = vmatprep.subr.mxu0 0.0
        %1084 = vmatpush1.xpose.msra.mxu0 %v1006
        %1085 = vmatprep.subr.mxu0 0.0
        %1086 = vmatpush1.xpose.msra.mxu0 %v1009
        %1087 = vmatprep.subr.mxu0 0.0
        %1088 = vmatpush1.xpose.msra.mxu0 %v1012
        %1089 = vmatprep.subr.mxu0 0.0
        %1090 = vmatpush1.xpose.msra.mxu0 %v1015
        %1091 = vmatprep.subr.mxu0 0.0
        %1092 = vmatpush1.xpose.msra.mxu0 %v1018
        %1093 = vmatprep.subr.mxu0 0.0
        %1094 = vmatpush1.xpose.msra.mxu0 %v1021
        %1095 = vmatprep.subr.mxu0 0.0
        %1096 = vmatpush1.xpose.msra.mxu0 %v1024
        %1097 = vmatprep.subr.mxu0 0.0
        %1098 = vmatpush1.xpose.msra.mxu0 %v1027
        %1099 = vmatprep.subr.mxu0 0.0
        %1100 = vmatpush1.xpose.msra.mxu0 %v1030
        %1101 = vmatprep.subr.mxu0 0.0
        %1102 = vmatpush1.xpose.msra.mxu0 %v1033
        %1103 = vmatprep.subr.mxu0 0.0
        %1104 = vmatpush1.xpose.msra.mxu0 %v1036
        %1105 = vmatprep.subr.mxu0 0.0
        %1106 = vmatpush1.xpose.msra.mxu0 %v1039
        %1107 = vmatprep.subr.mxu0 0.0
        %1108 = vmatpush1.xpose.msra.mxu0 %v1042
        %1109 = vmatprep.subr.mxu0 0.0
        %1110 = vmatpush1.xpose.msra.mxu0 %v1045
        %1111 = vmatprep.mubr.f32.mxu0 0.0
        %1112 = vmatmul.mubr.f32.gmra.mrb[0].mxu0 %v949
        %v1113 = vpop.f32.mrb[0].mxu0
        %v1114 = vadd.f32 0.0, %v1113
        %v1115 = vpop.f32.mrb[0].mxu0
        %v1116 = vadd.f32 0.0, %v1115
        %1117 = vdwg.mxu0
        %v1120 = vcombine.low %v1114, %v1116
        %v1122 = vunpack.c.l.s4 1966171168
        %v1123 = vunpack.c.0.s8 %v1122
        %v1124 = vlaneseq
        %v1125 = vshrl.u32 %v1124, 7
        %v1126 = vsub.s32 %v1123, %v1125
        %v1127 = vrot.slane %v1120, %v1126
        %v1129 = vunpack.c.l.s4 1966171168
        %v1130 = vunpack.c.0.s8 %v1129
        %v1131 = vlaneseq
        %v1132 = vshrl.u32 %v1131, 7
        %v1133 = vsub.s32 %v1130, %v1132
        %v1134 = vrot.slane %v1127, %v1133
        %v1136 = vlaneseq
        %vm1137 = vcmp.ge.s32.totalorder %v1136, 0
        %vm1138 = vcmp.lt.s32.totalorder %v1136, 256
        %vm1139 = vmand %vm1137, %vm1138
        %1140 = vst.msk [vmem:[%s137] sm:$0x3] %vm1139, %v1134
        %s1141 = sand.u32 %s71, 1
        %s1142 = scalar_lea.sflag [#allocation3], %s1141
        %s1143 = sand.u32 %s71, 1
        %s1144 = smul.addr %s1143, 2
        %s1145 = scalar_lea.vmem [#allocation2], %s1144
        // Predicated region
        $region29: #{decoder_forward.1} parent=27 // pred_check
          %p1146 = pneg %p81
        $region30: #{decoder_forward.1} parent=27 // pred_check_branch
          %1148 = sbr.rel (%p1146) target = $region32
        $region31: #{decoder_forward.1} parent=27 // pred_region
          %s1149 = smul.u32 2, %s16
          %s1151 = ssub.s32 32, 32
          %1152 = vsyncadd %s1142, %s1151
          %s1153 = smul.addr %s1149, 16
          %s1154 = scalar_lea.hbm %s2, %s1153
          %s1156 = sshll.u32 %s1145, 4
          %s1157 = int_to_ptr.vmem [resolvable:$true] %s1156
          %1159 = dma.vmem_to_hbm [thread:$0]  %s1157, 32, %s1154, %s1142
        $region32: #{decoder_forward.1} parent=27 // pred_fallthru
          _
      $region28: #{decoder_forward.1} parent=5 // pred_fallthru
        _
      %p1160 = scmp.le.s32.totalorder 2, %s11
      // Predicated region
      $region33: #{decoder_forward.1} parent=5 // pred_check
        %p1161 = pneg %p1160
      $region34: #{decoder_forward.1} parent=5 // pred_check_branch
        %1163 = sbr.rel (%p1161) target = $region36
      $region35: #{decoder_forward.1} parent=5 // pred_region
        %s1164 = ssub.s32 %s11, 2
        // Predicated region
        $region37: #{decoder_forward.1} parent=35 // pred_check
          %p1165 = pneg %p87
        $region38: #{decoder_forward.1} parent=35 // pred_check_branch
          %1167 = sbr.rel (%p1165) target = $region40
        $region39: #{decoder_forward.1} parent=35 // pred_region
          %s1168 = sand.u32 %s72, 1
          %s1169 = scalar_lea.sflag [#allocation3], %s1168
          %s1170 = sand.u32 %s72, 1
          %s1171 = smul.addr %s1170, 2
          %s1172 = scalar_lea.vmem [#allocation2], %s1171
          %1173 = dma.done %s1169, 32
        $region40: #{decoder_forward.1} parent=35 // pred_fallthru
          _
      $region36: #{decoder_forward.1} parent=5 // pred_fallthru
        _
    $region6: #{decoder_forward.1} parent=1 // loop_footer
      %s15 = sadd.s32 1, %s11
    $region7: #{decoder_forward.1} parent=1 // loop_footer_branch
      %10 = sbr.rel target = $region3
    $region8: #{decoder_forward.1} parent=1 // loop_exit
      _
    %1174 = vsyncpa [#allocation3], 1
    %s1175 = scalar_lea.sflag [#allocation3], 1
    %1176 = vsyncpa %s1175, 1

</llo_original>
